<compile_context>
chip_gen: v7x
topology: tpu7x:2x2x1
jax: 0.10.0
libtpu: 0.0.40
codegen_flags: <defaults>
</compile_context>

<pallas_src>
import numpy as np

import jax
import jax.numpy as jnp
from jax.experimental import pallas as pl
from jax.experimental.pallas import tpu as pltpu


# ------------------------- host-side interpolation ops -------------------------

def _bilinear_matrix_np(out_size: int, in_size: int) -> np.ndarray:
    """Separable interp matrix matching nn.Upsample(mode='bilinear', align_corners=True)."""
    if in_size == 1:
        return np.ones((out_size, 1), np.float32)
    if out_size == 1:
        # PyTorch align_corners=True uses scale 0 for out_size<=1 -> samples pixel 0.
        m = np.zeros((1, in_size), np.float32)
        m[0, 0] = 1.0
        return m
    src = np.arange(out_size, dtype=np.float64) * (in_size - 1) / (out_size - 1)
    lo = np.clip(np.floor(src).astype(np.int64), 0, in_size - 2)
    frac = (src - lo).astype(np.float32)
    rows = np.arange(out_size)
    m = np.zeros((out_size, in_size), np.float32)
    m[rows, lo] += 1.0 - frac
    m[rows, lo + 1] += frac
    return m


def _upsample_kron_t_np(hout: int, hin: int, wout: int, win: int) -> np.ndarray:
    """(Hin*Win, Hout*Wout) operator: flat_out = flat_in @ K^T with K = kron(Wh, Ww)."""
    wh = _bilinear_matrix_np(hout, hin)      # (Hout, Hin)
    ww = _bilinear_matrix_np(wout, win)      # (Wout, Win)
    k = np.kron(wh, ww)                      # (Hout*Wout, Hin*Win)
    return np.ascontiguousarray(k.T.astype(np.float32))


# ------------------------------- fused kernel -------------------------------

def _make_fused_fpn_kernel(num_levels, batch, c0, hw_list, k_idx, num_k, last_upsamples):
    inv_hw = [1.0 / float(hw) for hw in hw_list]
    n_in = 2 * num_levels + num_k + (1 if last_upsamples else 0)

    def kernel(*refs):
        f_refs = refs[:num_levels]                        # (N, Cin_l, H*W_l) each
        w_refs = refs[num_levels:2 * num_levels]          # (C0, Cin_l) each
        k_refs = refs[2 * num_levels:2 * num_levels + num_k]   # full kron^T mats
        kbar_ref = refs[2 * num_levels + num_k] if last_upsamples else None
        o_ref = refs[n_in]                                # (N, L*C0)

        # Hoist constant loads out of the unrolled batch loop (loaded exactly once).
        w_vals = [w_refs[l][...].astype(jnp.float32) for l in range(num_levels)]
        k_vals = [k_refs[i][...].astype(jnp.float32) for i in range(num_k)]
        kbar = kbar_ref[...].astype(jnp.float32) if last_upsamples else None

        rows = []
        for n in range(batch):                            # N is tiny & static -> unrolled
            prev = None
            pooled_rows = []
            for l in range(num_levels):
                is_last = (l == num_levels - 1)
                if not is_last:
                    # 1x1 conv on the MXU: (C0, Cin) @ (Cin, H*W) -> (C0, H*W)
                    curr = jnp.dot(w_vals[l], f_refs[l][n].astype(jnp.float32),
                                   preferred_element_type=jnp.float32)
                    if prev is None:
                        prev = curr
                    elif k_idx[l] is None:
                        prev = prev + curr                 # shapes already match
                    else:
                        # bilinear 2x upsample (align_corners=True) as a single
                        # matmul with kron(Wh, Ww)^T, then residual add.
                        prev = jnp.dot(prev, k_vals[k_idx[l]],
                                       preferred_element_type=jnp.float32) + curr
                    # TODO(synk): Broadcast2BlockMod smoothing treated as identity.
                    # AdaptiveAvgPool2d(1): lane reduce while the tile is in VMEM.
                    pooled = jnp.sum(prev, axis=1, keepdims=True) * inv_hw[l]   # (C0, 1)
                else:
                    # Folded last level: only its pooled mean is ever used, so
                    #   mean(conv(X))       = W @ mean_spatial(X)
                    #   mean(upsample(p))   = p @ rowmean(K^T)
                    # and the full (C0, HoutWout) map is never materialized.
                    xbar = jnp.sum(f_refs[l][n].astype(jnp.float32), axis=1,
                                   keepdims=True) * inv_hw[l]                    # (Cin, 1)
                    pooled = jnp.dot(w_vals[l], xbar,
                                     preferred_element_type=jnp.float32)         # (C0, 1)
                    if prev is not None:
                        if k_idx[l] is None:
                            pooled = pooled + (jnp.sum(prev, axis=1, keepdims=True)
                                               * inv_hw[l])
                        else:
                            pooled = pooled + jnp.dot(prev, kbar,
                                                      preferred_element_type=jnp.float32)
                pooled_rows.append(pooled.reshape(1, c0))
            rows.append(jnp.concatenate(pooled_rows, axis=1))    # (1, L*C0)

        # One store of the whole (N, L*C0) result; matches torch.cat(out_list, dim=1).
        o_ref[...] = jnp.concatenate(rows, axis=0).astype(o_ref.dtype)

    return kernel


# --------------------------- module forward pass ---------------------------

def feature_pyramid_module(f_map_list, down_ch_weights):
    """Forward of FeaturePyramidModule (up_sample_method='bilinear', bias=False).

    f_map_list[i]: (N, C_i, H_i, W_i) in NCHW, i from shallow to deep.
    down_ch_weights[j]: (C0, Cin_j, 1, 1) for reversed(f_map_list)[j].
    Returns (N, L*C0) pooled features (smoothing block = identity, see TODO).
    """
    f_rev = list(reversed(f_map_list))
    num_levels = len(f_rev)
    assert num_levels == len(down_ch_weights)
    batch = f_rev[0].shape[0]
    c0 = down_ch_weights[0].shape[0]
    dtype = f_rev[0].dtype

    # Flatten spatial dims (free, contiguous reshapes) and squeeze the 1x1 kernels.
    f_flat, w_flat, hw_list, spatial = [], [], [], []
    for f, w in zip(f_rev, down_ch_weights):
        n, cin, h, wd = f.shape
        assert n == batch and w.shape == (c0, cin, 1, 1)
        f_flat.append(f.reshape(batch, cin, h * wd))
        w_flat.append(w.reshape(c0, cin))
        hw_list.append(h * wd)
        spatial.append((h, wd))

    # Static per-level upsample plan.  Non-last levels that change shape get the
    # full kron(Wh, Ww)^T operator; the LAST level only needs its row-mean vector
    # (pooled-only fold); equal-shape levels need nothing.
    k_mats, k_idx = [], []
    kbar = None
    prev_hw = None
    for l, (h, wd) in enumerate(spatial):
        if l == 0 or (h, wd) == prev_hw:
            k_idx.append(None)
        else:
            hout, wout = 2 * prev_hw[0], 2 * prev_hw[1]
            assert (hout, wout) == (h, wd), (
                "bilinear scale-2 upsample must match the next level's spatial size")
            kt = _upsample_kron_t_np(hout, prev_hw[0], wout, prev_hw[1])
            if l == num_levels - 1:
                kbar = jnp.asarray(kt.mean(axis=1, keepdims=True))   # (HinWin, 1)
                k_idx.append(-1)   # sentinel: last level upsamples via kbar
            else:
                k_idx.append(len(k_mats))
                k_mats.append(jnp.asarray(kt))
        prev_hw = (h, wd)
    last_upsamples = kbar is not None

    kernel = _make_fused_fpn_kernel(num_levels, batch, c0, hw_list, k_idx,
                                    len(k_mats), last_upsamples)

    args = list(f_flat) + list(w_flat) + list(k_mats)
    if last_upsamples:
        args.append(kbar)

    vmem_spec = pl.BlockSpec(memory_space=pltpu.MemorySpace.VMEM)
    out = pl.pallas_call(
        kernel,
        in_specs=[vmem_spec] * len(args),
        out_specs=vmem_spec,
        out_shape=jax.ShapeDtypeStruct((batch, num_levels * c0), dtype),
    )(*args)
    return out


# ------------------------------ pure-JAX reference ------------------------------

def _reference(f_map_list, down_ch_weights):
    f_rev = list(reversed(f_map_list))
    prev = None
    outs = []
    for f, w in zip(f_rev, down_ch_weights):
        wm = w.reshape(w.shape[0], w.shape[1])
        curr = jnp.einsum('oc,nchw->nohw', wm, f)
        if prev is None:
            prev = curr
        else:
            if prev.shape != curr.shape:
                hin, win = prev.shape[2], prev.shape[3]
                wh = jnp.asarray(_bilinear_matrix_np(2 * hin, hin))
                ww = jnp.asarray(_bilinear_matrix_np(2 * win, win))
                prev = jnp.einsum('ah,nchw,bw->ncab', wh, prev, ww)
            prev = prev + curr
        outs.append(jnp.mean(prev, axis=(2, 3)))
    return jnp.concatenate(outs, axis=1)


# ----------------------------------- main -----------------------------------

if __name__ == "__main__":
    key = jax.random.PRNGKey(0)
    channel_list = [4, 8, 16, 32]
    stage_ch_list = channel_list[1:]            # [8, 16, 32]
    c0 = stage_ch_list[0]
    batch, base_hw = 2, 16

    # feature maps at strides 1x, 2x, 4x (NCHW), deterministic inputs
    k_in, k_w = jax.random.split(key)
    f_map_list = []
    for s, ch in enumerate(stage_ch_list):
        k_in, k = jax.random.split(k_in)
        hw = base_hw // (2 ** s)
        f_map_list.append(jax.random.normal(k, (batch, ch, hw, hw), jnp.float32))

    # down_ch_conv weights: 1x1 convs mapping reversed(stage_ch_list) -> c0 (bias=False)
    down_ch_weights = []
    for ch in reversed(stage_ch_list):
        k_w, k = jax.random.split(k_w)
        w = jax.random.normal(k, (c0, ch, 1, 1), jnp.float32) * (1.0 / jnp.sqrt(ch))
        down_ch_weights.append(w)

    out = feature_pyramid_module(f_map_list, down_ch_weights)
    out = jax.block_until_ready(out)
    assert out.shape == (batch, c0 * len(stage_ch_list)), out.shape

    ref = jax.block_until_ready(_reference(f_map_list, down_ch_weights))
    err = float(jnp.max(jnp.abs(out - ref)))
    assert jnp.allclose(out, ref, rtol=1e-3, atol=1e-3), err

    print("KERNEL_OK")
</pallas_src>

<mosaic_0001>
module attributes {stable_mosaic.version = 11 : i64} {
  func.func @kernel(%arg0: memref<2x32x16xf32, #tpu.memory_space<vmem>>, %arg1: memref<2x16x64xf32, #tpu.memory_space<vmem>>, %arg2: memref<2x8x256xf32, #tpu.memory_space<vmem>>, %arg3: memref<8x32xf32, #tpu.memory_space<vmem>>, %arg4: memref<8x16xf32, #tpu.memory_space<vmem>>, %arg5: memref<8x8xf32, #tpu.memory_space<vmem>>, %arg6: memref<16x64xf32, #tpu.memory_space<vmem>>, %arg7: memref<64x1xf32, #tpu.memory_space<vmem>>, %arg8: memref<2x24xf32, #tpu.memory_space<vmem>>) attributes {dimension_semantics = [], scalar_prefetch = 0 : i64, scratch_operands = 0 : i64, tpu.core_type = #tpu.core_type<tc>} {
    %c0 = arith.constant 0 : index
    %c0_0 = arith.constant 0 : index
    %0 = vector.load %arg3[%c0, %c0_0] : memref<8x32xf32, #tpu.memory_space<vmem>>, vector<8x32xf32>
    %c0_1 = arith.constant 0 : index
    %c0_2 = arith.constant 0 : index
    %1 = vector.load %arg4[%c0_1, %c0_2] : memref<8x16xf32, #tpu.memory_space<vmem>>, vector<8x16xf32>
    %c0_3 = arith.constant 0 : index
    %c0_4 = arith.constant 0 : index
    %2 = vector.load %arg5[%c0_3, %c0_4] : memref<8x8xf32, #tpu.memory_space<vmem>>, vector<8x8xf32>
    %c0_5 = arith.constant 0 : index
    %c0_6 = arith.constant 0 : index
    %3 = vector.load %arg6[%c0_5, %c0_6] : memref<16x64xf32, #tpu.memory_space<vmem>>, vector<16x64xf32>
    %c0_7 = arith.constant 0 : index
    %c0_8 = arith.constant 0 : index
    %4 = vector.load %arg7[%c0_7, %c0_8] : memref<64x1xf32, #tpu.memory_space<vmem>>, vector<64x1xf32>
    %c0_9 = arith.constant 0 : index
    %c0_10 = arith.constant 0 : index
    %c0_11 = arith.constant 0 : index
    %5 = vector.load %arg0[%c0_9, %c0_10, %c0_11] : memref<2x32x16xf32, #tpu.memory_space<vmem>>, vector<1x32x16xf32>
    %6 = vector.shape_cast %5 : vector<1x32x16xf32> to vector<32x16xf32>
    %cst = arith.constant dense<0.000000e+00> : vector<8x16xf32>
    %7 = tpu.matmul %0, %6, %cst {dimension_numbers = #tpu.dot_dimension_numbers<[1], [0], [0], [1], [0, 0, 1, 1], [], []>} : vector<8x32xf32>, vector<32x16xf32>, vector<8x16xf32> -> vector<8x16xf32>
    %cst_12 = arith.constant dense<0.000000e+00> : vector<8xf32>
    %8 = vector.multi_reduction <add>, %7, %cst_12 [1] : vector<8x16xf32> to vector<8xf32>
    %9 = vector.shape_cast %8 : vector<8xf32> to vector<8x1xf32>
    %cst_13 = arith.constant 6.250000e-02 : f32
    %10 = vector.broadcast %cst_13 : f32 to vector<8x1xf32>
    %11 = arith.mulf %9, %10 : vector<8x1xf32>
    %12 = vector.shape_cast %11 : vector<8x1xf32> to vector<1x8xf32>
    %c0_14 = arith.constant 0 : index
    %c0_15 = arith.constant 0 : index
    %c0_16 = arith.constant 0 : index
    %13 = vector.load %arg1[%c0_14, %c0_15, %c0_16] : memref<2x16x64xf32, #tpu.memory_space<vmem>>, vector<1x16x64xf32>
    %14 = vector.shape_cast %13 : vector<1x16x64xf32> to vector<16x64xf32>
    %cst_17 = arith.constant dense<0.000000e+00> : vector<8x64xf32>
    %15 = tpu.matmul %1, %14, %cst_17 {dimension_numbers = #tpu.dot_dimension_numbers<[1], [0], [0], [1], [0, 0, 1, 1], [], []>} : vector<8x16xf32>, vector<16x64xf32>, vector<8x64xf32> -> vector<8x64xf32>
    %cst_18 = arith.constant dense<0.000000e+00> : vector<8x64xf32>
    %16 = tpu.matmul %7, %3, %cst_18 {dimension_numbers = #tpu.dot_dimension_numbers<[1], [0], [0], [1], [0, 0, 1, 1], [], []>} : vector<8x16xf32>, vector<16x64xf32>, vector<8x64xf32> -> vector<8x64xf32>
    %17 = arith.addf %16, %15 : vector<8x64xf32>
    %cst_19 = arith.constant dense<0.000000e+00> : vector<8xf32>
    %18 = vector.multi_reduction <add>, %17, %cst_19 [1] : vector<8x64xf32> to vector<8xf32>
    %19 = vector.shape_cast %18 : vector<8xf32> to vector<8x1xf32>
    %cst_20 = arith.constant 1.562500e-02 : f32
    %20 = vector.broadcast %cst_20 : f32 to vector<8x1xf32>
    %21 = arith.mulf %19, %20 : vector<8x1xf32>
    %22 = vector.shape_cast %21 : vector<8x1xf32> to vector<1x8xf32>
    %c0_21 = arith.constant 0 : index
    %c0_22 = arith.constant 0 : index
    %c0_23 = arith.constant 0 : index
    %23 = vector.load %arg2[%c0_21, %c0_22, %c0_23] : memref<2x8x256xf32, #tpu.memory_space<vmem>>, vector<1x8x256xf32>
    %24 = vector.shape_cast %23 : vector<1x8x256xf32> to vector<8x256xf32>
    %cst_24 = arith.constant dense<0.000000e+00> : vector<8xf32>
    %25 = vector.multi_reduction <add>, %24, %cst_24 [1] : vector<8x256xf32> to vector<8xf32>
    %26 = vector.shape_cast %25 : vector<8xf32> to vector<8x1xf32>
    %cst_25 = arith.constant 3.906250e-03 : f32
    %27 = vector.broadcast %cst_25 : f32 to vector<8x1xf32>
    %28 = arith.mulf %26, %27 : vector<8x1xf32>
    %cst_26 = arith.constant dense<0.000000e+00> : vector<8x1xf32>
    %29 = tpu.matmul %2, %28, %cst_26 {dimension_numbers = #tpu.dot_dimension_numbers<[1], [0], [0], [1], [0, 0, 1, 1], [], []>} : vector<8x8xf32>, vector<8x1xf32>, vector<8x1xf32> -> vector<8x1xf32>
    %cst_27 = arith.constant dense<0.000000e+00> : vector<8x1xf32>
    %30 = tpu.matmul %17, %4, %cst_27 {dimension_numbers = #tpu.dot_dimension_numbers<[1], [0], [0], [1], [0, 0, 1, 1], [], []>} : vector<8x64xf32>, vector<64x1xf32>, vector<8x1xf32> -> vector<8x1xf32>
    %31 = arith.addf %29, %30 : vector<8x1xf32>
    %32 = vector.shape_cast %31 : vector<8x1xf32> to vector<1x8xf32>
    %33 = tpu.concatenate %12, %22, %32 in 1 : vector<1x8xf32>, vector<1x8xf32>, vector<1x8xf32> -> vector<1x24xf32>
    %c1 = arith.constant 1 : index
    %c0_28 = arith.constant 0 : index
    %c0_29 = arith.constant 0 : index
    %34 = vector.load %arg0[%c1, %c0_28, %c0_29] : memref<2x32x16xf32, #tpu.memory_space<vmem>>, vector<1x32x16xf32>
    %35 = vector.shape_cast %34 : vector<1x32x16xf32> to vector<32x16xf32>
    %cst_30 = arith.constant dense<0.000000e+00> : vector<8x16xf32>
    %36 = tpu.matmul %0, %35, %cst_30 {dimension_numbers = #tpu.dot_dimension_numbers<[1], [0], [0], [1], [0, 0, 1, 1], [], []>} : vector<8x32xf32>, vector<32x16xf32>, vector<8x16xf32> -> vector<8x16xf32>
    %cst_31 = arith.constant dense<0.000000e+00> : vector<8xf32>
    %37 = vector.multi_reduction <add>, %36, %cst_31 [1] : vector<8x16xf32> to vector<8xf32>
    %38 = vector.shape_cast %37 : vector<8xf32> to vector<8x1xf32>
    %cst_32 = arith.constant 6.250000e-02 : f32
    %39 = vector.broadcast %cst_32 : f32 to vector<8x1xf32>
    %40 = arith.mulf %38, %39 : vector<8x1xf32>
    %41 = vector.shape_cast %40 : vector<8x1xf32> to vector<1x8xf32>
    %c1_33 = arith.constant 1 : index
    %c0_34 = arith.constant 0 : index
    %c0_35 = arith.constant 0 : index
    %42 = vector.load %arg1[%c1_33, %c0_34, %c0_35] : memref<2x16x64xf32, #tpu.memory_space<vmem>>, vector<1x16x64xf32>
    %43 = vector.shape_cast %42 : vector<1x16x64xf32> to vector<16x64xf32>
    %cst_36 = arith.constant dense<0.000000e+00> : vector<8x64xf32>
    %44 = tpu.matmul %1, %43, %cst_36 {dimension_numbers = #tpu.dot_dimension_numbers<[1], [0], [0], [1], [0, 0, 1, 1], [], []>} : vector<8x16xf32>, vector<16x64xf32>, vector<8x64xf32> -> vector<8x64xf32>
    %cst_37 = arith.constant dense<0.000000e+00> : vector<8x64xf32>
    %45 = tpu.matmul %36, %3, %cst_37 {dimension_numbers = #tpu.dot_dimension_numbers<[1], [0], [0], [1], [0, 0, 1, 1], [], []>} : vector<8x16xf32>, vector<16x64xf32>, vector<8x64xf32> -> vector<8x64xf32>
    %46 = arith.addf %45, %44 : vector<8x64xf32>
    %cst_38 = arith.constant dense<0.000000e+00> : vector<8xf32>
    %47 = vector.multi_reduction <add>, %46, %cst_38 [1] : vector<8x64xf32> to vector<8xf32>
    %48 = vector.shape_cast %47 : vector<8xf32> to vector<8x1xf32>
    %cst_39 = arith.constant 1.562500e-02 : f32
    %49 = vector.broadcast %cst_39 : f32 to vector<8x1xf32>
    %50 = arith.mulf %48, %49 : vector<8x1xf32>
    %51 = vector.shape_cast %50 : vector<8x1xf32> to vector<1x8xf32>
    %c1_40 = arith.constant 1 : index
    %c0_41 = arith.constant 0 : index
    %c0_42 = arith.constant 0 : index
    %52 = vector.load %arg2[%c1_40, %c0_41, %c0_42] : memref<2x8x256xf32, #tpu.memory_space<vmem>>, vector<1x8x256xf32>
    %53 = vector.shape_cast %52 : vector<1x8x256xf32> to vector<8x256xf32>
    %cst_43 = arith.constant dense<0.000000e+00> : vector<8xf32>
    %54 = vector.multi_reduction <add>, %53, %cst_43 [1] : vector<8x256xf32> to vector<8xf32>
    %55 = vector.shape_cast %54 : vector<8xf32> to vector<8x1xf32>
    %cst_44 = arith.constant 3.906250e-03 : f32
    %56 = vector.broadcast %cst_44 : f32 to vector<8x1xf32>
    %57 = arith.mulf %55, %56 : vector<8x1xf32>
    %cst_45 = arith.constant dense<0.000000e+00> : vector<8x1xf32>
    %58 = tpu.matmul %2, %57, %cst_45 {dimension_numbers = #tpu.dot_dimension_numbers<[1], [0], [0], [1], [0, 0, 1, 1], [], []>} : vector<8x8xf32>, vector<8x1xf32>, vector<8x1xf32> -> vector<8x1xf32>
    %cst_46 = arith.constant dense<0.000000e+00> : vector<8x1xf32>
    %59 = tpu.matmul %46, %4, %cst_46 {dimension_numbers = #tpu.dot_dimension_numbers<[1], [0], [0], [1], [0, 0, 1, 1], [], []>} : vector<8x64xf32>, vector<64x1xf32>, vector<8x1xf32> -> vector<8x1xf32>
    %60 = arith.addf %58, %59 : vector<8x1xf32>
    %61 = vector.shape_cast %60 : vector<8x1xf32> to vector<1x8xf32>
    %62 = tpu.concatenate %41, %51, %61 in 1 : vector<1x8xf32>, vector<1x8xf32>, vector<1x8xf32> -> vector<1x24xf32>
    %63 = tpu.concatenate %33, %62 in 0 : vector<1x24xf32>, vector<1x24xf32> -> vector<2x24xf32>
    %c0_47 = arith.constant 0 : index
    %c0_48 = arith.constant 0 : index
    %64 = vector.load %arg8[%c0_47, %c0_48] : memref<2x24xf32, #tpu.memory_space<vmem>>, vector<2x24xf32>
    tpu.vector_store %arg8[%c0_47, %c0_48], %63 {strides = array<i32>} : memref<2x24xf32, #tpu.memory_space<vmem>>, vector<2x24xf32>,
    return
  }
}

</mosaic_0001>

<llo_original>
// kernel: tpu_custom_call.1
$region0: #{tpu_custom_call.1}
  #allocation0 [shape = 'u32[]', space=smem, size = 0x4, offset = 0x4, fixed_abs, tag = 'smem constant byte address 0x4 - core index']
  #allocation1 [shape = 'u32[144,128]{1,0:T(1,128)}', space=vmem, size = 0x12000, scoped, tag = 'internal scratch']
  %s0 = inlined_call_operand.vmem [shape: f32[2,32,16], index: 0, kind: input, shape index: {}]
  %s1 = inlined_call_operand.vmem [shape: f32[2,16,64], index: 1, kind: input, shape index: {}]
  %s2 = inlined_call_operand.vmem [shape: f32[2,8,256], index: 2, kind: input, shape index: {}]
  %s3 = inlined_call_operand.vmem [shape: f32[8,32], index: 3, kind: input, shape index: {}]
  %s4 = inlined_call_operand.vmem [shape: f32[8,16], index: 4, kind: input, shape index: {}]
  %s5 = inlined_call_operand.vmem [shape: f32[8,8], index: 5, kind: input, shape index: {}]
  %s6 = inlined_call_operand.vmem [shape: f32[16,64], index: 6, kind: input, shape index: {}]
  %s7 = inlined_call_operand.vmem [shape: f32[64,1], index: 7, kind: input, shape index: {}]
  %s8 = inlined_call_operand.hbm [shape: f32[2,24], index: 8, kind: output, shape index: {}]
  %s9 = sld [smem:[#allocation0]]
  $region42: #{tpu_custom_call.1} parent=0
    _
  %s11 = ssub.s32 1, %s9
  %s12 = scalar_select 0, %s11, %s9
  $region1: #{tpu_custom_call.1} parent=0
    #allocation2 [shape = 'u8[1024]{0}', space=vmem, size = 0x400, scoped, tag = 'output window, operand 0, single buffered']
    #allocation3 [shape = 's32[1]{0}', space=sflag, size = 0x4, scoped, tag = 'scoped memory for tpu_custom_call.1']
    %13 = vsyncpa [#allocation3], 0
    // Predicated region
    $region2: #{tpu_custom_call.1} parent=1 // pred_check
      _
    $region3: #{tpu_custom_call.1} parent=1 // pred_check_branch
      %15 = sbr.rel (0) target = $region5
    $region4: #{tpu_custom_call.1} parent=1 // pred_region
      _
    $region5: #{tpu_custom_call.1} parent=1 // pred_fallthru
      _
    // Predicated region
    $region6: #{tpu_custom_call.1} parent=1 // pred_check
      _
    $region7: #{tpu_custom_call.1} parent=1 // pred_check_branch
      %17 = sbr.rel (0) target = $region9
    $region8: #{tpu_custom_call.1} parent=1 // pred_region
      _
    $region9: #{tpu_custom_call.1} parent=1 // pred_fallthru
      _
    // Predicated region
    $region10: #{tpu_custom_call.1} parent=1 // pred_check
      _
    $region11: #{tpu_custom_call.1} parent=1 // pred_check_branch
      %19 = sbr.rel (0) target = $region13
    $region12: #{tpu_custom_call.1} parent=1 // pred_region
      _
    $region13: #{tpu_custom_call.1} parent=1 // pred_fallthru
      _
    // Predicated region
    $region14: #{tpu_custom_call.1} parent=1 // pred_check
      _
    $region15: #{tpu_custom_call.1} parent=1 // pred_check_branch
      %21 = sbr.rel (0) target = $region17
    $region16: #{tpu_custom_call.1} parent=1 // pred_region
      _
    $region17: #{tpu_custom_call.1} parent=1 // pred_fallthru
      _
    // Predicated region
    $region18: #{tpu_custom_call.1} parent=1 // pred_check
      _
    $region19: #{tpu_custom_call.1} parent=1 // pred_check_branch
      %23 = sbr.rel (0) target = $region21
    $region20: #{tpu_custom_call.1} parent=1 // pred_region
      _
    $region21: #{tpu_custom_call.1} parent=1 // pred_fallthru
      _
    // Predicated region
    $region22: #{tpu_custom_call.1} parent=1 // pred_check
      _
    $region23: #{tpu_custom_call.1} parent=1 // pred_check_branch
      %25 = sbr.rel (0) target = $region25
    $region24: #{tpu_custom_call.1} parent=1 // pred_region
      _
    $region25: #{tpu_custom_call.1} parent=1 // pred_fallthru
      _
    // Predicated region
    $region26: #{tpu_custom_call.1} parent=1 // pred_check
      _
    $region27: #{tpu_custom_call.1} parent=1 // pred_check_branch
      %27 = sbr.rel (0) target = $region29
    $region28: #{tpu_custom_call.1} parent=1 // pred_region
      _
    $region29: #{tpu_custom_call.1} parent=1 // pred_fallthru
      _
    // Predicated region
    $region30: #{tpu_custom_call.1} parent=1 // pred_check
      _
    $region31: #{tpu_custom_call.1} parent=1 // pred_check_branch
      %29 = sbr.rel (0) target = $region33
    $region32: #{tpu_custom_call.1} parent=1 // pred_region
      _
    $region33: #{tpu_custom_call.1} parent=1 // pred_fallthru
      _
    %v30 = vld [vmem:[%s3] sm:$0xff]
    %v31 = vld [vmem:[%s4] sm:$0xff]
    %v32 = vld [vmem:[%s5] sm:$0xff]
    %v33 = vld [vmem:[%s6] sm:$0xff]
    %v34 = vld [vmem:[%s6 + $0x8] sm:$0xff]
    %v35 = vld [vmem:[%s7] sm:$0xff]
    %v36 = vld [vmem:[%s7 + $0x8] sm:$0xff]
    %v37 = vld [vmem:[%s7 + $0x10] sm:$0xff]
    %v38 = vld [vmem:[%s7 + $0x18] sm:$0xff]
    %v39 = vld [vmem:[%s7 + $0x20] sm:$0xff]
    %v40 = vld [vmem:[%s7 + $0x28] sm:$0xff]
    %v41 = vld [vmem:[%s7 + $0x30] sm:$0xff]
    %v42 = vld [vmem:[%s7 + $0x38] sm:$0xff]
    %v43 = vld [vmem:[%s0] sm:$0xff]
    %v44 = vld [vmem:[%s0 + $0x8] sm:$0xff]
    %v45 = vld [vmem:[%s0 + $0x10] sm:$0xff]
    %v46 = vld [vmem:[%s0 + $0x18] sm:$0xff]
    %vm47 = vcmask 261120
    %v49 = vsel %vm47, %v30, 0
    %51 = vmatprep.subr.mxu0 0.0
    %52 = vmatpush1.msra.mxu0 %v43
    %53 = vmatprep.subr.mxu0 0.0
    %54 = vmatpush1.msra.mxu0 %v44
    %55 = vmatprep.subr.mxu0 0.0
    %56 = vmatpush1.msra.mxu0 %v45
    %57 = vmatprep.subr.mxu0 0.0
    %58 = vmatpush1.msra.mxu0 %v46
    %59 = vmatprep.subr.mxu0 0.0
    %60 = vmatpush1.msra.mxu0 0.0
    %61 = vmatprep.subr.mxu0 0.0
    %62 = vmatpush1.msra.mxu0 0.0
    %63 = vmatprep.subr.mxu0 0.0
    %64 = vmatpush1.msra.mxu0 0.0
    %65 = vmatprep.subr.mxu0 0.0
    %66 = vmatpush1.msra.mxu0 0.0
    %67 = vmatprep.subr.mxu0 0.0
    %68 = vmatpush1.msra.mxu0 0.0
    %69 = vmatprep.subr.mxu0 0.0
    %70 = vmatpush1.msra.mxu0 0.0
    %71 = vmatprep.subr.mxu0 0.0
    %72 = vmatpush1.msra.mxu0 0.0
    %73 = vmatprep.subr.mxu0 0.0
    %74 = vmatpush1.msra.mxu0 0.0
    %75 = vmatprep.subr.mxu0 0.0
    %76 = vmatpush1.msra.mxu0 0.0
    %77 = vmatprep.subr.mxu0 0.0
    %78 = vmatpush1.msra.mxu0 0.0
    %79 = vmatprep.subr.mxu0 0.0
    %80 = vmatpush1.msra.mxu0 0.0
    %81 = vmatprep.subr.mxu0 0.0
    %82 = vmatpush1.msra.mxu0 0.0
    %83 = vmatprep.subr.mxu0 0.0
    %84 = vmatpush1.msra.mxu0 0.0
    %85 = vmatprep.subr.mxu0 0.0
    %86 = vmatpush1.msra.mxu0 0.0
    %87 = vmatprep.subr.mxu0 0.0
    %88 = vmatpush1.msra.mxu0 0.0
    %89 = vmatprep.subr.mxu0 0.0
    %90 = vmatpush1.msra.mxu0 0.0
    %91 = vmatprep.subr.mxu0 0.0
    %92 = vmatpush1.msra.mxu0 0.0
    %93 = vmatprep.subr.mxu0 0.0
    %94 = vmatpush1.msra.mxu0 0.0
    %95 = vmatprep.subr.mxu0 0.0
    %96 = vmatpush1.msra.mxu0 0.0
    %97 = vmatprep.subr.mxu0 0.0
    %98 = vmatpush1.msra.mxu0 0.0
    %99 = vmatprep.subr.mxu0 0.0
    %100 = vmatpush1.msra.mxu0 0.0
    %101 = vmatprep.subr.mxu0 0.0
    %102 = vmatpush1.msra.mxu0 0.0
    %103 = vmatprep.subr.mxu0 0.0
    %104 = vmatpush1.msra.mxu0 0.0
    %105 = vmatprep.subr.mxu0 0.0
    %106 = vmatpush1.msra.mxu0 0.0
    %107 = vmatprep.subr.mxu0 0.0
    %108 = vmatpush1.msra.mxu0 0.0
    %109 = vmatprep.subr.mxu0 0.0
    %110 = vmatpush1.msra.mxu0 0.0
    %111 = vmatprep.subr.mxu0 0.0
    %112 = vmatpush1.msra.mxu0 0.0
    %113 = vmatprep.subr.mxu0 0.0
    %114 = vmatpush1.msra.mxu0 0.0
    %115 = vmatprep.mubr.f32.mxu0 0.0
    %116 = vmatmul.mubr.f32.gmra.mrb[0].mxu0 %v49
    %v117 = vpop.f32.mrb[0].mxu0
    %v118 = vadd.f32 0.0, %v117
    %v119 = vpop.f32.mrb[0].mxu0
    %120 = vdwg.mxu0
    %vm121 = vcmask 130048
    %v122 = vsel %vm121, %v118, 0.0
    %123 = vadd.xlane.f32.xlu0 %v122
    %v124 = vpop.xlane.xlu0 %123
    %v125 = vmul.f32 %v124, 0.0625
    %v126 = vld [vmem:[%s1] sm:$0xff]
    %v127 = vld [vmem:[%s1 + $0x8] sm:$0xff]
    %v129 = vsel %vm121, %v31, 0
    %131 = vmatprep.subr.mxu0 0.0
    %132 = vmatpush1.msra.mxu0 %v126
    %133 = vmatprep.subr.mxu0 0.0
    %134 = vmatpush1.msra.mxu0 %v127
    %135 = vmatprep.subr.mxu0 0.0
    %136 = vmatpush1.msra.mxu0 0.0
    %137 = vmatprep.subr.mxu0 0.0
    %138 = vmatpush1.msra.mxu0 0.0
    %139 = vmatprep.subr.mxu0 0.0
    %140 = vmatpush1.msra.mxu0 0.0
    %141 = vmatprep.subr.mxu0 0.0
    %142 = vmatpush1.msra.mxu0 0.0
    %143 = vmatprep.subr.mxu0 0.0
    %144 = vmatpush1.msra.mxu0 0.0
    %145 = vmatprep.subr.mxu0 0.0
    %146 = vmatpush1.msra.mxu0 0.0
    %147 = vmatprep.subr.mxu0 0.0
    %148 = vmatpush1.msra.mxu0 0.0
    %149 = vmatprep.subr.mxu0 0.0
    %150 = vmatpush1.msra.mxu0 0.0
    %151 = vmatprep.subr.mxu0 0.0
    %152 = vmatpush1.msra.mxu0 0.0
    %153 = vmatprep.subr.mxu0 0.0
    %154 = vmatpush1.msra.mxu0 0.0
    %155 = vmatprep.subr.mxu0 0.0
    %156 = vmatpush1.msra.mxu0 0.0
    %157 = vmatprep.subr.mxu0 0.0
    %158 = vmatpush1.msra.mxu0 0.0
    %159 = vmatprep.subr.mxu0 0.0
    %160 = vmatpush1.msra.mxu0 0.0
    %161 = vmatprep.subr.mxu0 0.0
    %162 = vmatpush1.msra.mxu0 0.0
    %163 = vmatprep.subr.mxu0 0.0
    %164 = vmatpush1.msra.mxu0 0.0
    %165 = vmatprep.subr.mxu0 0.0
    %166 = vmatpush1.msra.mxu0 0.0
    %167 = vmatprep.subr.mxu0 0.0
    %168 = vmatpush1.msra.mxu0 0.0
    %169 = vmatprep.subr.mxu0 0.0
    %170 = vmatpush1.msra.mxu0 0.0
    %171 = vmatprep.subr.mxu0 0.0
    %172 = vmatpush1.msra.mxu0 0.0
    %173 = vmatprep.subr.mxu0 0.0
    %174 = vmatpush1.msra.mxu0 0.0
    %175 = vmatprep.subr.mxu0 0.0
    %176 = vmatpush1.msra.mxu0 0.0
    %177 = vmatprep.subr.mxu0 0.0
    %178 = vmatpush1.msra.mxu0 0.0
    %179 = vmatprep.subr.mxu0 0.0
    %180 = vmatpush1.msra.mxu0 0.0
    %181 = vmatprep.subr.mxu0 0.0
    %182 = vmatpush1.msra.mxu0 0.0
    %183 = vmatprep.subr.mxu0 0.0
    %184 = vmatpush1.msra.mxu0 0.0
    %185 = vmatprep.subr.mxu0 0.0
    %186 = vmatpush1.msra.mxu0 0.0
    %187 = vmatprep.subr.mxu0 0.0
    %188 = vmatpush1.msra.mxu0 0.0
    %189 = vmatprep.subr.mxu0 0.0
    %190 = vmatpush1.msra.mxu0 0.0
    %191 = vmatprep.subr.mxu0 0.0
    %192 = vmatpush1.msra.mxu0 0.0
    %193 = vmatprep.subr.mxu0 0.0
    %194 = vmatpush1.msra.mxu0 0.0
    %195 = vmatprep.mubr.f32.mxu0 0.0
    %196 = vmatmul.mubr.f32.gmra.mrb[0].mxu0 %v129
    %v197 = vpop.f32.mrb[0].mxu0
    %v198 = vadd.f32 0.0, %v197
    %v199 = vpop.f32.mrb[0].mxu0
    %200 = vdwg.mxu0
    %v202 = vsel %vm121, %v118, 0
    %204 = vmatprep.subr.mxu0 0.0
    %205 = vmatpush1.msra.mxu0 %v33
    %206 = vmatprep.subr.mxu0 0.0
    %207 = vmatpush1.msra.mxu0 %v34
    %208 = vmatprep.subr.mxu0 0.0
    %209 = vmatpush1.msra.mxu0 0.0
    %210 = vmatprep.subr.mxu0 0.0
    %211 = vmatpush1.msra.mxu0 0.0
    %212 = vmatprep.subr.mxu0 0.0
    %213 = vmatpush1.msra.mxu0 0.0
    %214 = vmatprep.subr.mxu0 0.0
    %215 = vmatpush1.msra.mxu0 0.0
    %216 = vmatprep.subr.mxu0 0.0
    %217 = vmatpush1.msra.mxu0 0.0
    %218 = vmatprep.subr.mxu0 0.0
    %219 = vmatpush1.msra.mxu0 0.0
    %220 = vmatprep.subr.mxu0 0.0
    %221 = vmatpush1.msra.mxu0 0.0
    %222 = vmatprep.subr.mxu0 0.0
    %223 = vmatpush1.msra.mxu0 0.0
    %224 = vmatprep.subr.mxu0 0.0
    %225 = vmatpush1.msra.mxu0 0.0
    %226 = vmatprep.subr.mxu0 0.0
    %227 = vmatpush1.msra.mxu0 0.0
    %228 = vmatprep.subr.mxu0 0.0
    %229 = vmatpush1.msra.mxu0 0.0
    %230 = vmatprep.subr.mxu0 0.0
    %231 = vmatpush1.msra.mxu0 0.0
    %232 = vmatprep.subr.mxu0 0.0
    %233 = vmatpush1.msra.mxu0 0.0
    %234 = vmatprep.subr.mxu0 0.0
    %235 = vmatpush1.msra.mxu0 0.0
    %236 = vmatprep.subr.mxu0 0.0
    %237 = vmatpush1.msra.mxu0 0.0
    %238 = vmatprep.subr.mxu0 0.0
    %239 = vmatpush1.msra.mxu0 0.0
    %240 = vmatprep.subr.mxu0 0.0
    %241 = vmatpush1.msra.mxu0 0.0
    %242 = vmatprep.subr.mxu0 0.0
    %243 = vmatpush1.msra.mxu0 0.0
    %244 = vmatprep.subr.mxu0 0.0
    %245 = vmatpush1.msra.mxu0 0.0
    %246 = vmatprep.subr.mxu0 0.0
    %247 = vmatpush1.msra.mxu0 0.0
    %248 = vmatprep.subr.mxu0 0.0
    %249 = vmatpush1.msra.mxu0 0.0
    %250 = vmatprep.subr.mxu0 0.0
    %251 = vmatpush1.msra.mxu0 0.0
    %252 = vmatprep.subr.mxu0 0.0
    %253 = vmatpush1.msra.mxu0 0.0
    %254 = vmatprep.subr.mxu0 0.0
    %255 = vmatpush1.msra.mxu0 0.0
    %256 = vmatprep.subr.mxu0 0.0
    %257 = vmatpush1.msra.mxu0 0.0
    %258 = vmatprep.subr.mxu0 0.0
    %259 = vmatpush1.msra.mxu0 0.0
    %260 = vmatprep.subr.mxu0 0.0
    %261 = vmatpush1.msra.mxu0 0.0
    %262 = vmatprep.subr.mxu0 0.0
    %263 = vmatpush1.msra.mxu0 0.0
    %264 = vmatprep.subr.mxu0 0.0
    %265 = vmatpush1.msra.mxu0 0.0
    %266 = vmatprep.subr.mxu0 0.0
    %267 = vmatpush1.msra.mxu0 0.0
    %268 = vmatprep.mubr.f32.mxu0 0.0
    %269 = vmatmul.mubr.f32.gmra.mrb[0].mxu0 %v202
    %v270 = vpop.f32.mrb[0].mxu0
    %v271 = vadd.f32 %v198, %v270
    %v272 = vpop.f32.mrb[0].mxu0
    %273 = vdwg.mxu0
    %vm274 = vcmask 523264
    %v275 = vsel %vm274, %v271, 0.0
    %276 = vadd.xlane.f32.xlu0 %v275
    %v277 = vpop.xlane.xlu0 %276
    %v278 = vmul.f32 %v277, 0.015625
    %v279 = vld [vmem:[%s2] sm:$0xff]
    %v280 = vld [vmem:[%s2 + $0x8] sm:$0xff]
    %v281 = vadd.f32 %v279, %v280
    %282 = vadd.xlane.f32.xlu0 %v281
    %v283 = vpop.xlane.xlu0 %282
    %v284 = vmul.f32 %v283, 0.00390625
    %v286 = vsel %vm274, %v271, 0
    %288 = vmatprep.subr.mxu0 0.0
    %289 = vmatpush1.msra.mxu0 %v35
    %290 = vmatprep.subr.mxu0 0.0
    %291 = vmatpush1.msra.mxu0 %v36
    %292 = vmatprep.subr.mxu0 0.0
    %293 = vmatpush1.msra.mxu0 %v37
    %294 = vmatprep.subr.mxu0 0.0
    %295 = vmatpush1.msra.mxu0 %v38
    %296 = vmatprep.subr.mxu0 0.0
    %297 = vmatpush1.msra.mxu0 %v39
    %298 = vmatprep.subr.mxu0 0.0
    %299 = vmatpush1.msra.mxu0 %v40
    %300 = vmatprep.subr.mxu0 0.0
    %301 = vmatpush1.msra.mxu0 %v41
    %302 = vmatprep.subr.mxu0 0.0
    %303 = vmatpush1.msra.mxu0 %v42
    %304 = vmatprep.subr.mxu0 0.0
    %305 = vmatpush1.msra.mxu0 0.0
    %306 = vmatprep.subr.mxu0 0.0
    %307 = vmatpush1.msra.mxu0 0.0
    %308 = vmatprep.subr.mxu0 0.0
    %309 = vmatpush1.msra.mxu0 0.0
    %310 = vmatprep.subr.mxu0 0.0
    %311 = vmatpush1.msra.mxu0 0.0
    %312 = vmatprep.subr.mxu0 0.0
    %313 = vmatpush1.msra.mxu0 0.0
    %314 = vmatprep.subr.mxu0 0.0
    %315 = vmatpush1.msra.mxu0 0.0
    %316 = vmatprep.subr.mxu0 0.0
    %317 = vmatpush1.msra.mxu0 0.0
    %318 = vmatprep.subr.mxu0 0.0
    %319 = vmatpush1.msra.mxu0 0.0
    %320 = vmatprep.subr.mxu0 0.0
    %321 = vmatpush1.msra.mxu0 0.0
    %322 = vmatprep.subr.mxu0 0.0
    %323 = vmatpush1.msra.mxu0 0.0
    %324 = vmatprep.subr.mxu0 0.0
    %325 = vmatpush1.msra.mxu0 0.0
    %326 = vmatprep.subr.mxu0 0.0
    %327 = vmatpush1.msra.mxu0 0.0
    %328 = vmatprep.subr.mxu0 0.0
    %329 = vmatpush1.msra.mxu0 0.0
    %330 = vmatprep.subr.mxu0 0.0
    %331 = vmatpush1.msra.mxu0 0.0
    %332 = vmatprep.subr.mxu0 0.0
    %333 = vmatpush1.msra.mxu0 0.0
    %334 = vmatprep.subr.mxu0 0.0
    %335 = vmatpush1.msra.mxu0 0.0
    %336 = vmatprep.subr.mxu0 0.0
    %337 = vmatpush1.msra.mxu0 0.0
    %338 = vmatprep.subr.mxu0 0.0
    %339 = vmatpush1.msra.mxu0 0.0
    %340 = vmatprep.subr.mxu0 0.0
    %341 = vmatpush1.msra.mxu0 0.0
    %342 = vmatprep.subr.mxu0 0.0
    %343 = vmatpush1.msra.mxu0 0.0
    %344 = vmatprep.subr.mxu0 0.0
    %345 = vmatpush1.msra.mxu0 0.0
    %346 = vmatprep.subr.mxu0 0.0
    %347 = vmatpush1.msra.mxu0 0.0
    %348 = vmatprep.subr.mxu0 0.0
    %349 = vmatpush1.msra.mxu0 0.0
    %350 = vmatprep.subr.mxu0 0.0
    %351 = vmatpush1.msra.mxu0 0.0
    %352 = vmatprep.mubr.f32.mxu0 0.0
    %353 = vmatmul.mubr.f32.gmra.mrb[0].mxu0 %v286
    %v354 = vpop.f32.mrb[0].mxu0
    %v355 = vadd.f32 0.0, %v354
    %v356 = vpop.f32.mrb[0].mxu0
    %357 = vdwg.mxu0
    %vm358 = vcmask 64512
    %v360 = vsel %vm358, %v32, 0
    %362 = vmatprep.subr.mxu0 0.0
    %363 = vmatpush1.msra.mxu0 %v284
    %364 = vmatprep.subr.mxu0 0.0
    %365 = vmatpush1.msra.mxu0 0.0
    %366 = vmatprep.subr.mxu0 0.0
    %367 = vmatpush1.msra.mxu0 0.0
    %368 = vmatprep.subr.mxu0 0.0
    %369 = vmatpush1.msra.mxu0 0.0
    %370 = vmatprep.subr.mxu0 0.0
    %371 = vmatpush1.msra.mxu0 0.0
    %372 = vmatprep.subr.mxu0 0.0
    %373 = vmatpush1.msra.mxu0 0.0
    %374 = vmatprep.subr.mxu0 0.0
    %375 = vmatpush1.msra.mxu0 0.0
    %376 = vmatprep.subr.mxu0 0.0
    %377 = vmatpush1.msra.mxu0 0.0
    %378 = vmatprep.subr.mxu0 0.0
    %379 = vmatpush1.msra.mxu0 0.0
    %380 = vmatprep.subr.mxu0 0.0
    %381 = vmatpush1.msra.mxu0 0.0
    %382 = vmatprep.subr.mxu0 0.0
    %383 = vmatpush1.msra.mxu0 0.0
    %384 = vmatprep.subr.mxu0 0.0
    %385 = vmatpush1.msra.mxu0 0.0
    %386 = vmatprep.subr.mxu0 0.0
    %387 = vmatpush1.msra.mxu0 0.0
    %388 = vmatprep.subr.mxu0 0.0
    %389 = vmatpush1.msra.mxu0 0.0
    %390 = vmatprep.subr.mxu0 0.0
    %391 = vmatpush1.msra.mxu0 0.0
    %392 = vmatprep.subr.mxu0 0.0
    %393 = vmatpush1.msra.mxu0 0.0
    %394 = vmatprep.subr.mxu0 0.0
    %395 = vmatpush1.msra.mxu0 0.0
    %396 = vmatprep.subr.mxu0 0.0
    %397 = vmatpush1.msra.mxu0 0.0
    %398 = vmatprep.subr.mxu0 0.0
    %399 = vmatpush1.msra.mxu0 0.0
    %400 = vmatprep.subr.mxu0 0.0
    %401 = vmatpush1.msra.mxu0 0.0
    %402 = vmatprep.subr.mxu0 0.0
    %403 = vmatpush1.msra.mxu0 0.0
    %404 = vmatprep.subr.mxu0 0.0
    %405 = vmatpush1.msra.mxu0 0.0
    %406 = vmatprep.subr.mxu0 0.0
    %407 = vmatpush1.msra.mxu0 0.0
    %408 = vmatprep.subr.mxu0 0.0
    %409 = vmatpush1.msra.mxu0 0.0
    %410 = vmatprep.subr.mxu0 0.0
    %411 = vmatpush1.msra.mxu0 0.0
    %412 = vmatprep.subr.mxu0 0.0
    %413 = vmatpush1.msra.mxu0 0.0
    %414 = vmatprep.subr.mxu0 0.0
    %415 = vmatpush1.msra.mxu0 0.0
    %416 = vmatprep.subr.mxu0 0.0
    %417 = vmatpush1.msra.mxu0 0.0
    %418 = vmatprep.subr.mxu0 0.0
    %419 = vmatpush1.msra.mxu0 0.0
    %420 = vmatprep.subr.mxu0 0.0
    %421 = vmatpush1.msra.mxu0 0.0
    %422 = vmatprep.subr.mxu0 0.0
    %423 = vmatpush1.msra.mxu0 0.0
    %424 = vmatprep.subr.mxu0 0.0
    %425 = vmatpush1.msra.mxu0 0.0
    %426 = vmatprep.mubr.f32.mxu0 0.0
    %427 = vmatmul.mubr.f32.gmra.mrb[0].mxu0 %v360
    %v428 = vpop.f32.mrb[0].mxu0
    %v429 = vadd.f32 %v355, %v428
    %v430 = vpop.f32.mrb[0].mxu0
    %431 = vdwg.mxu0
    %v433 = vlaneseq
    %v434 = vand.u32 %v433, 127
    %v435 = vlaneseq
    %v436 = vshrl.u32 %v435, 7
    %v437 = vsub.s32 %v434, %v436
    %v438 = vrot.slane %v125, %v437
    %v441 = vadd.s32 %v434, 4294967288
    %v442 = vlaneseq
    %v443 = vshrl.u32 %v442, 7
    %v444 = vsub.s32 %v441, %v443
    %v445 = vrot.slane %v278, %v444
    %448 = vset.pattern.permute.xlu0 0
    %449 = vperm.xlu0 %448, %v429
    %v450 = vpop.permute.xlu0 %449
    %v451 = vadd.s32 %v434, 4294967280
    %v452 = vlaneseq
    %v453 = vshrl.u32 %v452, 7
    %v454 = vsub.s32 %v451, %v453
    %v455 = vrot.slane %v450, %v454
    %v457 = vsel %vm358, %v438, %v445
    %v458 = vsel %vm121, %v457, %v455
    %s459 = scalar_lea.vmem %s0, 32
    %v460 = vld [vmem:[%s459] sm:$0xff]
    %v461 = vld [vmem:[%s459 + $0x8] sm:$0xff]
    %v462 = vld [vmem:[%s459 + $0x10] sm:$0xff]
    %v463 = vld [vmem:[%s459 + $0x18] sm:$0xff]
    %464 = vmatprep.subr.mxu0 0.0
    %465 = vmatpush1.msra.mxu0 %v460
    %466 = vmatprep.subr.mxu0 0.0
    %467 = vmatpush1.msra.mxu0 %v461
    %468 = vmatprep.subr.mxu0 0.0
    %469 = vmatpush1.msra.mxu0 %v462
    %470 = vmatprep.subr.mxu0 0.0
    %471 = vmatpush1.msra.mxu0 %v463
    %472 = vmatprep.subr.mxu0 0.0
    %473 = vmatpush1.msra.mxu0 0.0
    %474 = vmatprep.subr.mxu0 0.0
    %475 = vmatpush1.msra.mxu0 0.0
    %476 = vmatprep.subr.mxu0 0.0
    %477 = vmatpush1.msra.mxu0 0.0
    %478 = vmatprep.subr.mxu0 0.0
    %479 = vmatpush1.msra.mxu0 0.0
    %480 = vmatprep.subr.mxu0 0.0
    %481 = vmatpush1.msra.mxu0 0.0
    %482 = vmatprep.subr.mxu0 0.0
    %483 = vmatpush1.msra.mxu0 0.0
    %484 = vmatprep.subr.mxu0 0.0
    %485 = vmatpush1.msra.mxu0 0.0
    %486 = vmatprep.subr.mxu0 0.0
    %487 = vmatpush1.msra.mxu0 0.0
    %488 = vmatprep.subr.mxu0 0.0
    %489 = vmatpush1.msra.mxu0 0.0
    %490 = vmatprep.subr.mxu0 0.0
    %491 = vmatpush1.msra.mxu0 0.0
    %492 = vmatprep.subr.mxu0 0.0
    %493 = vmatpush1.msra.mxu0 0.0
    %494 = vmatprep.subr.mxu0 0.0
    %495 = vmatpush1.msra.mxu0 0.0
    %496 = vmatprep.subr.mxu0 0.0
    %497 = vmatpush1.msra.mxu0 0.0
    %498 = vmatprep.subr.mxu0 0.0
    %499 = vmatpush1.msra.mxu0 0.0
    %500 = vmatprep.subr.mxu0 0.0
    %501 = vmatpush1.msra.mxu0 0.0
    %502 = vmatprep.subr.mxu0 0.0
    %503 = vmatpush1.msra.mxu0 0.0
    %504 = vmatprep.subr.mxu0 0.0
    %505 = vmatpush1.msra.mxu0 0.0
    %506 = vmatprep.subr.mxu0 0.0
    %507 = vmatpush1.msra.mxu0 0.0
    %508 = vmatprep.subr.mxu0 0.0
    %509 = vmatpush1.msra.mxu0 0.0
    %510 = vmatprep.subr.mxu0 0.0
    %511 = vmatpush1.msra.mxu0 0.0
    %512 = vmatprep.subr.mxu0 0.0
    %513 = vmatpush1.msra.mxu0 0.0
    %514 = vmatprep.subr.mxu0 0.0
    %515 = vmatpush1.msra.mxu0 0.0
    %516 = vmatprep.subr.mxu0 0.0
    %517 = vmatpush1.msra.mxu0 0.0
    %518 = vmatprep.subr.mxu0 0.0
    %519 = vmatpush1.msra.mxu0 0.0
    %520 = vmatprep.subr.mxu0 0.0
    %521 = vmatpush1.msra.mxu0 0.0
    %522 = vmatprep.subr.mxu0 0.0
    %523 = vmatpush1.msra.mxu0 0.0
    %524 = vmatprep.subr.mxu0 0.0
    %525 = vmatpush1.msra.mxu0 0.0
    %526 = vmatprep.subr.mxu0 0.0
    %527 = vmatpush1.msra.mxu0 0.0
    %528 = vmatprep.mubr.f32.mxu0 0.0
    %529 = vmatmul.mubr.f32.gmra.mrb[0].mxu0 %v49
    %v530 = vpop.f32.mrb[0].mxu0
    %v531 = vadd.f32 0.0, %v530
    %v532 = vpop.f32.mrb[0].mxu0
    %533 = vdwg.mxu0
    %v534 = vsel %vm121, %v531, 0.0
    %535 = vadd.xlane.f32.xlu0 %v534
    %v536 = vpop.xlane.xlu0 %535
    %v537 = vmul.f32 %v536, 0.0625
    %s538 = scalar_lea.vmem %s1, 16
    %v539 = vld [vmem:[%s538] sm:$0xff]
    %v540 = vld [vmem:[%s538 + $0x8] sm:$0xff]
    %541 = vmatprep.subr.mxu0 0.0
    %542 = vmatpush1.msra.mxu0 %v539
    %543 = vmatprep.subr.mxu0 0.0
    %544 = vmatpush1.msra.mxu0 %v540
    %545 = vmatprep.subr.mxu0 0.0
    %546 = vmatpush1.msra.mxu0 0.0
    %547 = vmatprep.subr.mxu0 0.0
    %548 = vmatpush1.msra.mxu0 0.0
    %549 = vmatprep.subr.mxu0 0.0
    %550 = vmatpush1.msra.mxu0 0.0
    %551 = vmatprep.subr.mxu0 0.0
    %552 = vmatpush1.msra.mxu0 0.0
    %553 = vmatprep.subr.mxu0 0.0
    %554 = vmatpush1.msra.mxu0 0.0
    %555 = vmatprep.subr.mxu0 0.0
    %556 = vmatpush1.msra.mxu0 0.0
    %557 = vmatprep.subr.mxu0 0.0
    %558 = vmatpush1.msra.mxu0 0.0
    %559 = vmatprep.subr.mxu0 0.0
    %560 = vmatpush1.msra.mxu0 0.0
    %561 = vmatprep.subr.mxu0 0.0
    %562 = vmatpush1.msra.mxu0 0.0
    %563 = vmatprep.subr.mxu0 0.0
    %564 = vmatpush1.msra.mxu0 0.0
    %565 = vmatprep.subr.mxu0 0.0
    %566 = vmatpush1.msra.mxu0 0.0
    %567 = vmatprep.subr.mxu0 0.0
    %568 = vmatpush1.msra.mxu0 0.0
    %569 = vmatprep.subr.mxu0 0.0
    %570 = vmatpush1.msra.mxu0 0.0
    %571 = vmatprep.subr.mxu0 0.0
    %572 = vmatpush1.msra.mxu0 0.0
    %573 = vmatprep.subr.mxu0 0.0
    %574 = vmatpush1.msra.mxu0 0.0
    %575 = vmatprep.subr.mxu0 0.0
    %576 = vmatpush1.msra.mxu0 0.0
    %577 = vmatprep.subr.mxu0 0.0
    %578 = vmatpush1.msra.mxu0 0.0
    %579 = vmatprep.subr.mxu0 0.0
    %580 = vmatpush1.msra.mxu0 0.0
    %581 = vmatprep.subr.mxu0 0.0
    %582 = vmatpush1.msra.mxu0 0.0
    %583 = vmatprep.subr.mxu0 0.0
    %584 = vmatpush1.msra.mxu0 0.0
    %585 = vmatprep.subr.mxu0 0.0
    %586 = vmatpush1.msra.mxu0 0.0
    %587 = vmatprep.subr.mxu0 0.0
    %588 = vmatpush1.msra.mxu0 0.0
    %589 = vmatprep.subr.mxu0 0.0
    %590 = vmatpush1.msra.mxu0 0.0
    %591 = vmatprep.subr.mxu0 0.0
    %592 = vmatpush1.msra.mxu0 0.0
    %593 = vmatprep.subr.mxu0 0.0
    %594 = vmatpush1.msra.mxu0 0.0
    %595 = vmatprep.subr.mxu0 0.0
    %596 = vmatpush1.msra.mxu0 0.0
    %597 = vmatprep.subr.mxu0 0.0
    %598 = vmatpush1.msra.mxu0 0.0
    %599 = vmatprep.subr.mxu0 0.0
    %600 = vmatpush1.msra.mxu0 0.0
    %601 = vmatprep.subr.mxu0 0.0
    %602 = vmatpush1.msra.mxu0 0.0
    %603 = vmatprep.subr.mxu0 0.0
    %604 = vmatpush1.msra.mxu0 0.0
    %605 = vmatprep.mubr.f32.mxu0 0.0
    %606 = vmatmul.mubr.f32.gmra.mrb[0].mxu0 %v129
    %v607 = vpop.f32.mrb[0].mxu0
    %v608 = vadd.f32 0.0, %v607
    %v609 = vpop.f32.mrb[0].mxu0
    %610 = vdwg.mxu0
    %v612 = vsel %vm121, %v531, 0
    %614 = vmatprep.subr.mxu0 0.0
    %615 = vmatpush1.msra.mxu0 %v33
    %616 = vmatprep.subr.mxu0 0.0
    %617 = vmatpush1.msra.mxu0 %v34
    %618 = vmatprep.subr.mxu0 0.0
    %619 = vmatpush1.msra.mxu0 0.0
    %620 = vmatprep.subr.mxu0 0.0
    %621 = vmatpush1.msra.mxu0 0.0
    %622 = vmatprep.subr.mxu0 0.0
    %623 = vmatpush1.msra.mxu0 0.0
    %624 = vmatprep.subr.mxu0 0.0
    %625 = vmatpush1.msra.mxu0 0.0
    %626 = vmatprep.subr.mxu0 0.0
    %627 = vmatpush1.msra.mxu0 0.0
    %628 = vmatprep.subr.mxu0 0.0
    %629 = vmatpush1.msra.mxu0 0.0
    %630 = vmatprep.subr.mxu0 0.0
    %631 = vmatpush1.msra.mxu0 0.0
    %632 = vmatprep.subr.mxu0 0.0
    %633 = vmatpush1.msra.mxu0 0.0
    %634 = vmatprep.subr.mxu0 0.0
    %635 = vmatpush1.msra.mxu0 0.0
    %636 = vmatprep.subr.mxu0 0.0
    %637 = vmatpush1.msra.mxu0 0.0
    %638 = vmatprep.subr.mxu0 0.0
    %639 = vmatpush1.msra.mxu0 0.0
    %640 = vmatprep.subr.mxu0 0.0
    %641 = vmatpush1.msra.mxu0 0.0
    %642 = vmatprep.subr.mxu0 0.0
    %643 = vmatpush1.msra.mxu0 0.0
    %644 = vmatprep.subr.mxu0 0.0
    %645 = vmatpush1.msra.mxu0 0.0
    %646 = vmatprep.subr.mxu0 0.0
    %647 = vmatpush1.msra.mxu0 0.0
    %648 = vmatprep.subr.mxu0 0.0
    %649 = vmatpush1.msra.mxu0 0.0
    %650 = vmatprep.subr.mxu0 0.0
    %651 = vmatpush1.msra.mxu0 0.0
    %652 = vmatprep.subr.mxu0 0.0
    %653 = vmatpush1.msra.mxu0 0.0
    %654 = vmatprep.subr.mxu0 0.0
    %655 = vmatpush1.msra.mxu0 0.0
    %656 = vmatprep.subr.mxu0 0.0
    %657 = vmatpush1.msra.mxu0 0.0
    %658 = vmatprep.subr.mxu0 0.0
    %659 = vmatpush1.msra.mxu0 0.0
    %660 = vmatprep.subr.mxu0 0.0
    %661 = vmatpush1.msra.mxu0 0.0
    %662 = vmatprep.subr.mxu0 0.0
    %663 = vmatpush1.msra.mxu0 0.0
    %664 = vmatprep.subr.mxu0 0.0
    %665 = vmatpush1.msra.mxu0 0.0
    %666 = vmatprep.subr.mxu0 0.0
    %667 = vmatpush1.msra.mxu0 0.0
    %668 = vmatprep.subr.mxu0 0.0
    %669 = vmatpush1.msra.mxu0 0.0
    %670 = vmatprep.subr.mxu0 0.0
    %671 = vmatpush1.msra.mxu0 0.0
    %672 = vmatprep.subr.mxu0 0.0
    %673 = vmatpush1.msra.mxu0 0.0
    %674 = vmatprep.subr.mxu0 0.0
    %675 = vmatpush1.msra.mxu0 0.0
    %676 = vmatprep.subr.mxu0 0.0
    %677 = vmatpush1.msra.mxu0 0.0
    %678 = vmatprep.mubr.f32.mxu0 0.0
    %679 = vmatmul.mubr.f32.gmra.mrb[0].mxu0 %v612
    %v680 = vpop.f32.mrb[0].mxu0
    %v681 = vadd.f32 %v608, %v680
    %v682 = vpop.f32.mrb[0].mxu0
    %683 = vdwg.mxu0
    %v684 = vsel %vm274, %v681, 0.0
    %685 = vadd.xlane.f32.xlu0 %v684
    %v686 = vpop.xlane.xlu0 %685
    %v687 = vmul.f32 %v686, 0.015625
    %s688 = scalar_lea.vmem %s2, 16
    %v689 = vld [vmem:[%s688] sm:$0xff]
    %v690 = vld [vmem:[%s688 + $0x8] sm:$0xff]
    %v691 = vadd.f32 %v689, %v690
    %692 = vadd.xlane.f32.xlu0 %v691
    %v693 = vpop.xlane.xlu0 %692
    %v694 = vmul.f32 %v693, 0.00390625
    %v696 = vsel %vm274, %v681, 0
    %698 = vmatprep.subr.mxu0 0.0
    %699 = vmatpush1.msra.mxu0 %v35
    %700 = vmatprep.subr.mxu0 0.0
    %701 = vmatpush1.msra.mxu0 %v36
    %702 = vmatprep.subr.mxu0 0.0
    %703 = vmatpush1.msra.mxu0 %v37
    %704 = vmatprep.subr.mxu0 0.0
    %705 = vmatpush1.msra.mxu0 %v38
    %706 = vmatprep.subr.mxu0 0.0
    %707 = vmatpush1.msra.mxu0 %v39
    %708 = vmatprep.subr.mxu0 0.0
    %709 = vmatpush1.msra.mxu0 %v40
    %710 = vmatprep.subr.mxu0 0.0
    %711 = vmatpush1.msra.mxu0 %v41
    %712 = vmatprep.subr.mxu0 0.0
    %713 = vmatpush1.msra.mxu0 %v42
    %714 = vmatprep.subr.mxu0 0.0
    %715 = vmatpush1.msra.mxu0 0.0
    %716 = vmatprep.subr.mxu0 0.0
    %717 = vmatpush1.msra.mxu0 0.0
    %718 = vmatprep.subr.mxu0 0.0
    %719 = vmatpush1.msra.mxu0 0.0
    %720 = vmatprep.subr.mxu0 0.0
    %721 = vmatpush1.msra.mxu0 0.0
    %722 = vmatprep.subr.mxu0 0.0
    %723 = vmatpush1.msra.mxu0 0.0
    %724 = vmatprep.subr.mxu0 0.0
    %725 = vmatpush1.msra.mxu0 0.0
    %726 = vmatprep.subr.mxu0 0.0
    %727 = vmatpush1.msra.mxu0 0.0
    %728 = vmatprep.subr.mxu0 0.0
    %729 = vmatpush1.msra.mxu0 0.0
    %730 = vmatprep.subr.mxu0 0.0
    %731 = vmatpush1.msra.mxu0 0.0
    %732 = vmatprep.subr.mxu0 0.0
    %733 = vmatpush1.msra.mxu0 0.0
    %734 = vmatprep.subr.mxu0 0.0
    %735 = vmatpush1.msra.mxu0 0.0
    %736 = vmatprep.subr.mxu0 0.0
    %737 = vmatpush1.msra.mxu0 0.0
    %738 = vmatprep.subr.mxu0 0.0
    %739 = vmatpush1.msra.mxu0 0.0
    %740 = vmatprep.subr.mxu0 0.0
    %741 = vmatpush1.msra.mxu0 0.0
    %742 = vmatprep.subr.mxu0 0.0
    %743 = vmatpush1.msra.mxu0 0.0
    %744 = vmatprep.subr.mxu0 0.0
    %745 = vmatpush1.msra.mxu0 0.0
    %746 = vmatprep.subr.mxu0 0.0
    %747 = vmatpush1.msra.mxu0 0.0
    %748 = vmatprep.subr.mxu0 0.0
    %749 = vmatpush1.msra.mxu0 0.0
    %750 = vmatprep.subr.mxu0 0.0
    %751 = vmatpush1.msra.mxu0 0.0
    %752 = vmatprep.subr.mxu0 0.0
    %753 = vmatpush1.msra.mxu0 0.0
    %754 = vmatprep.subr.mxu0 0.0
    %755 = vmatpush1.msra.mxu0 0.0
    %756 = vmatprep.subr.mxu0 0.0
    %757 = vmatpush1.msra.mxu0 0.0
    %758 = vmatprep.subr.mxu0 0.0
    %759 = vmatpush1.msra.mxu0 0.0
    %760 = vmatprep.subr.mxu0 0.0
    %761 = vmatpush1.msra.mxu0 0.0
    %762 = vmatprep.mubr.f32.mxu0 0.0
    %763 = vmatmul.mubr.f32.gmra.mrb[0].mxu0 %v696
    %v764 = vpop.f32.mrb[0].mxu0
    %v765 = vadd.f32 0.0, %v764
    %v766 = vpop.f32.mrb[0].mxu0
    %767 = vdwg.mxu0
    %768 = vmatprep.subr.mxu0 0.0
    %769 = vmatpush1.msra.mxu0 %v694
    %770 = vmatprep.subr.mxu0 0.0
    %771 = vmatpush1.msra.mxu0 0.0
    %772 = vmatprep.subr.mxu0 0.0
    %773 = vmatpush1.msra.mxu0 0.0
    %774 = vmatprep.subr.mxu0 0.0
    %775 = vmatpush1.msra.mxu0 0.0
    %776 = vmatprep.subr.mxu0 0.0
    %777 = vmatpush1.msra.mxu0 0.0
    %778 = vmatprep.subr.mxu0 0.0
    %779 = vmatpush1.msra.mxu0 0.0
    %780 = vmatprep.subr.mxu0 0.0
    %781 = vmatpush1.msra.mxu0 0.0
    %782 = vmatprep.subr.mxu0 0.0
    %783 = vmatpush1.msra.mxu0 0.0
    %784 = vmatprep.subr.mxu0 0.0
    %785 = vmatpush1.msra.mxu0 0.0
    %786 = vmatprep.subr.mxu0 0.0
    %787 = vmatpush1.msra.mxu0 0.0
    %788 = vmatprep.subr.mxu0 0.0
    %789 = vmatpush1.msra.mxu0 0.0
    %790 = vmatprep.subr.mxu0 0.0
    %791 = vmatpush1.msra.mxu0 0.0
    %792 = vmatprep.subr.mxu0 0.0
    %793 = vmatpush1.msra.mxu0 0.0
    %794 = vmatprep.subr.mxu0 0.0
    %795 = vmatpush1.msra.mxu0 0.0
    %796 = vmatprep.subr.mxu0 0.0
    %797 = vmatpush1.msra.mxu0 0.0
    %798 = vmatprep.subr.mxu0 0.0
    %799 = vmatpush1.msra.mxu0 0.0
    %800 = vmatprep.subr.mxu0 0.0
    %801 = vmatpush1.msra.mxu0 0.0
    %802 = vmatprep.subr.mxu0 0.0
    %803 = vmatpush1.msra.mxu0 0.0
    %804 = vmatprep.subr.mxu0 0.0
    %805 = vmatpush1.msra.mxu0 0.0
    %806 = vmatprep.subr.mxu0 0.0
    %807 = vmatpush1.msra.mxu0 0.0
    %808 = vmatprep.subr.mxu0 0.0
    %809 = vmatpush1.msra.mxu0 0.0
    %810 = vmatprep.subr.mxu0 0.0
    %811 = vmatpush1.msra.mxu0 0.0
    %812 = vmatprep.subr.mxu0 0.0
    %813 = vmatpush1.msra.mxu0 0.0
    %814 = vmatprep.subr.mxu0 0.0
    %815 = vmatpush1.msra.mxu0 0.0
    %816 = vmatprep.subr.mxu0 0.0
    %817 = vmatpush1.msra.mxu0 0.0
    %818 = vmatprep.subr.mxu0 0.0
    %819 = vmatpush1.msra.mxu0 0.0
    %820 = vmatprep.subr.mxu0 0.0
    %821 = vmatpush1.msra.mxu0 0.0
    %822 = vmatprep.subr.mxu0 0.0
    %823 = vmatpush1.msra.mxu0 0.0
    %824 = vmatprep.subr.mxu0 0.0
    %825 = vmatpush1.msra.mxu0 0.0
    %826 = vmatprep.subr.mxu0 0.0
    %827 = vmatpush1.msra.mxu0 0.0
    %828 = vmatprep.subr.mxu0 0.0
    %829 = vmatpush1.msra.mxu0 0.0
    %830 = vmatprep.subr.mxu0 0.0
    %831 = vmatpush1.msra.mxu0 0.0
    %832 = vmatprep.mubr.f32.mxu0 0.0
    %833 = vmatmul.mubr.f32.gmra.mrb[0].mxu0 %v360
    %v834 = vpop.f32.mrb[0].mxu0
    %v835 = vadd.f32 %v765, %v834
    %v836 = vpop.f32.mrb[0].mxu0
    %837 = vdwg.mxu0
    %v839 = vlaneseq
    %v840 = vshrl.u32 %v839, 7
    %v841 = vsub.s32 %v434, %v840
    %v842 = vrot.slane %v537, %v841
    %v845 = vlaneseq
    %v846 = vshrl.u32 %v845, 7
    %v847 = vsub.s32 %v441, %v846
    %v848 = vrot.slane %v687, %v847
    %851 = vset.pattern.permute.xlu0 0
    %852 = vperm.xlu0 %851, %v835
    %v853 = vpop.permute.xlu0 %852
    %v854 = vlaneseq
    %v855 = vshrl.u32 %v854, 7
    %v856 = vsub.s32 %v451, %v855
    %v857 = vrot.slane %v853, %v856
    %v859 = vsel %vm358, %v842, %v848
    %v860 = vsel %vm121, %v859, %v857
    %v862 = vrot.slane %v860, 7
    %vm864 = vcmask 1040384
    %v865 = vsel %vm864, %v458, %v862
    %vm866 = vcmask 189440
    %867 = vst.msk [vmem:[#allocation2] sm:$0x3] %vm866, %v865
    // Predicated region
    $region34: #{tpu_custom_call.1} parent=1 // pred_check
      _
    $region35: #{tpu_custom_call.1} parent=1 // pred_check_branch
      %869 = sbr.rel (0) target = $region37
    $region36: #{tpu_custom_call.1} parent=1 // pred_region
      %s871 = ssub.s32 32, 32
      %872 = vsyncadd [#allocation3], %s871
      %s874 = sshll.u32 [#allocation2], 4
      %s875 = int_to_ptr.vmem [resolvable:$true] %s874
      %877 = dma.vmem_to_hbm [thread:$0]  %s875, 32, %s8, [#allocation3]
    $region37: #{tpu_custom_call.1} parent=1 // pred_fallthru
      _
    // Predicated region
    $region38: #{tpu_custom_call.1} parent=1 // pred_check
      _
    $region39: #{tpu_custom_call.1} parent=1 // pred_check_branch
      %879 = sbr.rel (0) target = $region41
    $region40: #{tpu_custom_call.1} parent=1 // pred_region
      %880 = dma.done [#allocation3], 32
    $region41: #{tpu_custom_call.1} parent=1 // pred_fallthru
      _
    %881 = vsyncpa [#allocation3], 1

</llo_original>
